<compile_context>
chip_gen: v7x
topology: tpu7x:2x2x1
jax: 0.10.0
libtpu: 0.0.40
codegen_flags: <defaults>
</compile_context>

<pallas_src>
import jax
import jax.numpy as jnp
from jax.experimental import pallas as pl
from jax.experimental.pallas import tpu as pltpu


def _attention_kernel(x_ref, w_ref, b_ref, o_ref, num_ref, den_ref, xs_ref):
    # Grid: (batch_blocks, s_blocks); the S axis is a reduction ("arbitrary").
    # x_ref: (TB, Sc, F)   batch-block x S-chunk slab
    # w_ref: (1, F)        lane-dense projection weight (replicated)
    # b_ref: (1, Sc)       lane-dense bias chunk
    # o_ref: (TB, F)       pooled output block (written on the last S step)
    # num_ref/xs_ref: (TB, F) f32 scratch; den_ref: (TB, 1) f32 scratch
    j = pl.program_id(1)
    nj = pl.num_programs(1)

    @pl.when(j == 0)
    def _init():
        num_ref[...] = jnp.zeros_like(num_ref)
        den_ref[...] = jnp.zeros_like(den_ref)
        xs_ref[...] = jnp.zeros_like(xs_ref)

    x = x_ref[...].astype(jnp.float32)           # (TB, Sc, F)
    w = w_ref[...].astype(jnp.float32)           # (1, F)
    b = b_ref[...].astype(jnp.float32)           # (1, Sc)

    # Projection on the VPU + XLU lane reduce (no degenerate N=1 MXU matvec):
    #   eij[t, s] = sum_f x[t, s, f] * w[f]
    eij = jnp.sum(x * w[:, None, :], axis=-1)    # (TB, Sc)
    a = jnp.exp(jnp.tanh(eij + b))               # (TB, Sc), EUP tanh/exp

    num_ref[...] += jnp.sum(x * a[:, :, None], axis=1)   # (TB, F) sublane reduce
    den_ref[...] += jnp.sum(a, axis=-1, keepdims=True)   # (TB, 1)
    xs_ref[...] += jnp.sum(x, axis=1)                     # (TB, F)

    @pl.when(j == nj - 1)
    def _finalize():
        den = den_ref[...]
        inv = pl.reciprocal(den, approx=True)    # EUP slot
        inv = inv * (2.0 - den * inv)            # 1 Newton step -> full f32 accuracy
        # out = sum_s x*(a/den + 1e-10) == (sum_s x*a)/den + 1e-10*(sum_s x)
        o_ref[...] = (num_ref[...] * inv + 1e-10 * xs_ref[...]).astype(o_ref.dtype)


def _round_up(x, m):
    return ((x + m - 1) // m) * m


def _vmem_capacity_bytes():
    try:
        return int(pltpu.get_tpu_info().vmem_capacity_bytes)
    except Exception:
        return 64 * 1024 * 1024  # conservative (v7x per-TC); still >= all defaults


def attention_forward(x, weight, bias, *, per_buffer_bytes=None, vmem_limit_bytes=None):
    """x: (B, S, F) f32; weight: (F, 1) f32; bias: (S,) f32 -> (B, F) f32."""
    B, S, F = x.shape
    itemsize = x.dtype.itemsize
    w_row = weight.reshape(1, F)                 # lane-dense weight
    b_row = bias.reshape(1, S)                   # lane-dense bias

    # Generation-aware VMEM budgets (≈96 MiB on v5e/v6e, ≈48 MiB on v7x).
    if vmem_limit_bytes is None:
        vmem_limit_bytes = max(32 * 1024 * 1024, _vmem_capacity_bytes() * 3 // 4)
    if per_buffer_bytes is None:
        # x tile is double-buffered (=> 2x this) and body temps are ~2x one
        # (TB, Sc, F) slab, so limit/6 keeps total comfortably under the limit.
        per_buffer_bytes = max(1 * 1024 * 1024, vmem_limit_bytes // 6)

    # ---- batch tile TB ----
    row_bytes = S * F * itemsize
    if B <= 8:
        tb = B  # single block; block dims equal the full dims (no tiling constraint)
    else:
        tb = max(8, min(B, per_buffer_bytes // max(1, row_bytes)))
        tb = max(8, (tb // 8) * 8)
        if B >= 16:
            # Guarantee >= 2 batch blocks so the "parallel" axis shards across
            # both v7x TensorCores.
            tb = min(tb, _round_up(-(-B // 2), 8))
    n_b = pl.cdiv(B, tb)  # partial tail block handled by Pallas masking (no jnp.pad)

    # ---- sequence (reduction) tile Sc ----
    # Keep the pipelined x tile within the per-buffer budget.  Chunks must keep
    # the bias block lane-dense: a multiple of 128 that divides S (else full S).
    s_chunk = S
    if tb * S * F * itemsize > per_buffer_bytes:
        cands = [c for c in range(128, S, 128)
                 if S % c == 0 and tb * c * F * itemsize <= per_buffer_bytes]
        if cands:
            s_chunk = max(cands)
        # TODO(synk): rows with no legal multiple-of-128 S divisor that fits the
        # budget fall back to the full-row tile (vmem_limit still applies).
    n_s = S // s_chunk

    out = pl.pallas_call(
        _attention_kernel,
        out_shape=jax.ShapeDtypeStruct((B, F), x.dtype),
        grid_spec=pltpu.PrefetchScalarGridSpec(
            num_scalar_prefetch=0,
            grid=(n_b, n_s),
            in_specs=[
                pl.BlockSpec((tb, s_chunk, F), lambda i, j: (i, j, 0)),  # x slab
                pl.BlockSpec((1, F), lambda i, j: (0, 0)),               # weight
                pl.BlockSpec((1, s_chunk), lambda i, j: (0, j)),         # bias chunk
            ],
            out_specs=pl.BlockSpec((tb, F), lambda i, j: (i, 0)),
            scratch_shapes=[
                pltpu.VMEM((tb, F), jnp.float32),   # num  = sum_s x * a
                pltpu.VMEM((tb, 1), jnp.float32),   # den  = sum_s a
                pltpu.VMEM((tb, F), jnp.float32),   # xsum = sum_s x
            ],
        ),
        compiler_params=pltpu.CompilerParams(
            dimension_semantics=("parallel", "arbitrary"),
            vmem_limit_bytes=int(vmem_limit_bytes),
        ),
    )(x, w_row, b_row)

    return out


def _reference(x, weight, bias):
    # Pure-JAX reference mirroring the PyTorch forward (VPU-exact f32 projection,
    # no MXU precision ambiguity).
    eij = jnp.sum(x * weight.reshape(1, 1, -1), axis=-1)
    eij = jnp.tanh(eij + bias)
    a = jnp.exp(eij)
    a = a / jnp.sum(a, axis=1, keepdims=True) + 1e-10
    return jnp.sum(x * a[..., None], axis=1)


if __name__ == "__main__":
    key = jax.random.PRNGKey(0)
    kx, kw, kx2, kw2, kb2 = jax.random.split(key, 5)

    # --- small shapes consistent with the module (batch=2, step_dim=8, feature_dim=32) ---
    batch, step_dim, feature_dim = 2, 8, 32
    x = jax.random.normal(kx, (batch, step_dim, feature_dim), dtype=jnp.float32)
    bound = (6.0 / (feature_dim + 1)) ** 0.5     # xavier_uniform_ (fan_in=F, fan_out=1)
    weight = jax.random.uniform(kw, (feature_dim, 1), dtype=jnp.float32,
                                minval=-bound, maxval=bound)
    bias = jnp.zeros((step_dim,), dtype=jnp.float32)

    out = jax.block_until_ready(attention_forward(x, weight, bias))
    ref = _reference(x, weight, bias)
    assert out.shape == (batch, feature_dim)
    assert jnp.allclose(out, ref, atol=2e-5, rtol=2e-5), "mismatch vs reference (small)"

    # --- larger shape exercising the masked batch tail + S-reduction tiling paths ---
    B2, S2, F2 = 20, 512, 128
    x2 = jax.random.normal(kx2, (B2, S2, F2), dtype=jnp.float32)
    w2 = jax.random.uniform(kw2, (F2, 1), dtype=jnp.float32, minval=-0.1, maxval=0.1)
    b2 = 0.1 * jax.random.normal(kb2, (S2,), dtype=jnp.float32)
    out2 = jax.block_until_ready(
        attention_forward(x2, w2, b2, per_buffer_bytes=1 * 1024 * 1024))
    ref2 = _reference(x2, w2, b2)
    assert out2.shape == (B2, F2)
    assert jnp.allclose(out2, ref2, atol=2e-5, rtol=2e-5), "mismatch vs reference (tiled)"

    print("KERNEL_OK")
</pallas_src>

<mosaic_0001>
module attributes {stable_mosaic.version = 11 : i64} {
  func.func @_attention_kernel(%arg0: i32, %arg1: i32, %arg2: memref<2x8x32xf32, #tpu.memory_space<vmem>>, %arg3: memref<1x32xf32, #tpu.memory_space<vmem>>, %arg4: memref<1x8xf32, #tpu.memory_space<vmem>>, %arg5: memref<2x32xf32, #tpu.memory_space<vmem>>, %arg6: memref<2x32xf32, #tpu.memory_space<vmem>>, %arg7: memref<2x1xf32, #tpu.memory_space<vmem>>, %arg8: memref<2x32xf32, #tpu.memory_space<vmem>>) attributes {dimension_semantics = [#tpu.dimension_semantics<parallel>, #tpu.dimension_semantics<arbitrary>], iteration_bounds = array<i64: 1, 1>, scalar_prefetch = 0 : i64, scratch_operands = 3 : i64, tpu.core_type = #tpu.core_type<tc>, window_params = [{transform_indices = @transform_0, window_bounds = array<i64: 2, 8, 32>}, {pipeline_mode = #tpu.pipeline_mode<synchronous>, transform_indices = @transform_1, window_bounds = array<i64: 1, 32>}, {transform_indices = @transform_2, window_bounds = array<i64: 1, 8>}, {transform_indices = @transform_3, window_bounds = array<i64: 2, 32>}]} {
    %c0_i32 = arith.constant 0 : i32
    %0 = arith.cmpi eq, %arg1, %c0_i32 : i32
    %1 = arith.extui %0 : i1 to i32
    %c0_i32_0 = arith.constant 0 : i32
    %2 = arith.cmpi ne, %1, %c0_i32_0 : i32
    scf.if %2 {
      %cst_24 = arith.constant 0.000000e+00 : f32
      %33 = vector.broadcast %cst_24 : f32 to vector<2x32xf32>
      %c0_25 = arith.constant 0 : index
      %c0_26 = arith.constant 0 : index
      %34 = vector.load %arg6[%c0_25, %c0_26] : memref<2x32xf32, #tpu.memory_space<vmem>>, vector<2x32xf32>
      tpu.vector_store %arg6[%c0_25, %c0_26], %33 {strides = array<i32>} : memref<2x32xf32, #tpu.memory_space<vmem>>, vector<2x32xf32>,
      %cst_27 = arith.constant 0.000000e+00 : f32
      %35 = vector.broadcast %cst_27 : f32 to vector<2x1xf32>
      %c0_28 = arith.constant 0 : index
      %c0_29 = arith.constant 0 : index
      %36 = vector.load %arg7[%c0_28, %c0_29] : memref<2x1xf32, #tpu.memory_space<vmem>>, vector<2x1xf32>
      tpu.vector_store %arg7[%c0_28, %c0_29], %35 {strides = array<i32>} : memref<2x1xf32, #tpu.memory_space<vmem>>, vector<2x1xf32>,
      %cst_30 = arith.constant 0.000000e+00 : f32
      %37 = vector.broadcast %cst_30 : f32 to vector<2x32xf32>
      %c0_31 = arith.constant 0 : index
      %c0_32 = arith.constant 0 : index
      %38 = vector.load %arg8[%c0_31, %c0_32] : memref<2x32xf32, #tpu.memory_space<vmem>>, vector<2x32xf32>
      tpu.vector_store %arg8[%c0_31, %c0_32], %37 {strides = array<i32>} : memref<2x32xf32, #tpu.memory_space<vmem>>, vector<2x32xf32>,
    } else {
    }
    %c0 = arith.constant 0 : index
    %c0_1 = arith.constant 0 : index
    %c0_2 = arith.constant 0 : index
    %3 = vector.load %arg2[%c0, %c0_1, %c0_2] : memref<2x8x32xf32, #tpu.memory_space<vmem>>, vector<2x8x32xf32>
    %c0_3 = arith.constant 0 : index
    %c0_4 = arith.constant 0 : index
    %4 = vector.load %arg3[%c0_3, %c0_4] : memref<1x32xf32, #tpu.memory_space<vmem>>, vector<1x32xf32>
    %c0_5 = arith.constant 0 : index
    %c0_6 = arith.constant 0 : index
    %5 = vector.load %arg4[%c0_5, %c0_6] : memref<1x8xf32, #tpu.memory_space<vmem>>, vector<1x8xf32>
    %6 = vector.shape_cast %4 : vector<1x32xf32> to vector<1x1x32xf32>
    %7 = vector.broadcast %6 : vector<1x1x32xf32> to vector<2x8x32xf32>
    %8 = arith.mulf %3, %7 : vector<2x8x32xf32>
    %cst = arith.constant dense<0.000000e+00> : vector<2x8xf32>
    %9 = vector.multi_reduction <add>, %8, %cst [2] : vector<2x8x32xf32> to vector<2x8xf32>
    %10 = vector.broadcast %5 : vector<1x8xf32> to vector<2x8xf32>
    %11 = arith.addf %9, %10 : vector<2x8xf32>
    %12 = math.tanh %11 : vector<2x8xf32>
    %13 = math.exp %12 : vector<2x8xf32>
    %c0_7 = arith.constant 0 : index
    %c0_8 = arith.constant 0 : index
    %14 = vector.load %arg6[%c0_7, %c0_8] : memref<2x32xf32, #tpu.memory_space<vmem>>, vector<2x32xf32>
    %15 = vector.shape_cast %13 : vector<2x8xf32> to vector<2x8x1xf32>
    %16 = vector.broadcast %15 : vector<2x8x1xf32> to vector<2x8x32xf32>
    %17 = arith.mulf %3, %16 : vector<2x8x32xf32>
    %cst_9 = arith.constant dense<0.000000e+00> : vector<2x32xf32>
    %18 = vector.multi_reduction <add>, %17, %cst_9 [1] : vector<2x8x32xf32> to vector<2x32xf32>
    %19 = arith.addf %14, %18 : vector<2x32xf32>
    %c0_10 = arith.constant 0 : index
    %c0_11 = arith.constant 0 : index
    %20 = vector.load %arg6[%c0_10, %c0_11] : memref<2x32xf32, #tpu.memory_space<vmem>>, vector<2x32xf32>
    tpu.vector_store %arg6[%c0_10, %c0_11], %19 {strides = array<i32>} : memref<2x32xf32, #tpu.memory_space<vmem>>, vector<2x32xf32>,
    %c0_12 = arith.constant 0 : index
    %c0_13 = arith.constant 0 : index
    %21 = vector.load %arg7[%c0_12, %c0_13] : memref<2x1xf32, #tpu.memory_space<vmem>>, vector<2x1xf32>
    %cst_14 = arith.constant dense<0.000000e+00> : vector<2xf32>
    %22 = vector.multi_reduction <add>, %13, %cst_14 [1] : vector<2x8xf32> to vector<2xf32>
    %23 = vector.shape_cast %22 : vector<2xf32> to vector<2x1xf32>
    %24 = arith.addf %21, %23 : vector<2x1xf32>
    %c0_15 = arith.constant 0 : index
    %c0_16 = arith.constant 0 : index
    %25 = vector.load %arg7[%c0_15, %c0_16] : memref<2x1xf32, #tpu.memory_space<vmem>>, vector<2x1xf32>
    tpu.vector_store %arg7[%c0_15, %c0_16], %24 {strides = array<i32>} : memref<2x1xf32, #tpu.memory_space<vmem>>, vector<2x1xf32>,
    %c0_17 = arith.constant 0 : index
    %c0_18 = arith.constant 0 : index
    %26 = vector.load %arg8[%c0_17, %c0_18] : memref<2x32xf32, #tpu.memory_space<vmem>>, vector<2x32xf32>
    %cst_19 = arith.constant dense<0.000000e+00> : vector<2x32xf32>
    %27 = vector.multi_reduction <add>, %3, %cst_19 [1] : vector<2x8x32xf32> to vector<2x32xf32>
    %28 = arith.addf %26, %27 : vector<2x32xf32>
    %c0_20 = arith.constant 0 : index
    %c0_21 = arith.constant 0 : index
    %29 = vector.load %arg8[%c0_20, %c0_21] : memref<2x32xf32, #tpu.memory_space<vmem>>, vector<2x32xf32>
    tpu.vector_store %arg8[%c0_20, %c0_21], %28 {strides = array<i32>} : memref<2x32xf32, #tpu.memory_space<vmem>>, vector<2x32xf32>,
    %c0_i32_22 = arith.constant 0 : i32
    %30 = arith.cmpi eq, %arg1, %c0_i32_22 : i32
    %31 = arith.extui %30 : i1 to i32
    %c0_i32_23 = arith.constant 0 : i32
    %32 = arith.cmpi ne, %31, %c0_i32_23 : i32
    scf.if %32 {
      %c0_24 = arith.constant 0 : index
      %c0_25 = arith.constant 0 : index
      %33 = vector.load %arg7[%c0_24, %c0_25] : memref<2x1xf32, #tpu.memory_space<vmem>>, vector<2x1xf32>
      %34 = tpu.reciprocal %33 {approx = true} : vector<2x1xf32> -> vector<2x1xf32>
      %35 = arith.mulf %33, %34 : vector<2x1xf32>
      %cst_26 = arith.constant 2.000000e+00 : f32
      %36 = vector.broadcast %cst_26 : f32 to vector<2x1xf32>
      %37 = arith.subf %36, %35 : vector<2x1xf32>
      %38 = arith.mulf %34, %37 : vector<2x1xf32>
      %c0_27 = arith.constant 0 : index
      %c0_28 = arith.constant 0 : index
      %39 = vector.load %arg6[%c0_27, %c0_28] : memref<2x32xf32, #tpu.memory_space<vmem>>, vector<2x32xf32>
      %40 = vector.broadcast %38 : vector<2x1xf32> to vector<2x32xf32>
      %41 = arith.mulf %39, %40 : vector<2x32xf32>
      %c0_29 = arith.constant 0 : index
      %c0_30 = arith.constant 0 : index
      %42 = vector.load %arg8[%c0_29, %c0_30] : memref<2x32xf32, #tpu.memory_space<vmem>>, vector<2x32xf32>
      %cst_31 = arith.constant 1.000000e-10 : f32
      %43 = vector.broadcast %cst_31 : f32 to vector<2x32xf32>
      %44 = arith.mulf %43, %42 : vector<2x32xf32>
      %45 = arith.addf %41, %44 : vector<2x32xf32>
      %c0_32 = arith.constant 0 : index
      %c0_33 = arith.constant 0 : index
      %46 = vector.load %arg5[%c0_32, %c0_33] : memref<2x32xf32, #tpu.memory_space<vmem>>, vector<2x32xf32>
      tpu.vector_store %arg5[%c0_32, %c0_33], %45 {strides = array<i32>} : memref<2x32xf32, #tpu.memory_space<vmem>>, vector<2x32xf32>,
    } else {
    }
    return
  }
  func.func @transform_0(%arg0: i32, %arg1: i32) -> (i32, i32, i32) {
    %c0_i32 = arith.constant 0 : i32
    %c0_i32_0 = arith.constant 0 : i32
    return %arg0, %arg1, %c0_i32 : i32, i32, i32
  }
  func.func @transform_1(%arg0: i32, %arg1: i32) -> (i32, i32) {
    %c0_i32 = arith.constant 0 : i32
    %c0_i32_0 = arith.constant 0 : i32
    %c0_i32_1 = arith.constant 0 : i32
    return %c0_i32, %c0_i32_0 : i32, i32
  }
  func.func @transform_2(%arg0: i32, %arg1: i32) -> (i32, i32) {
    %c0_i32 = arith.constant 0 : i32
    %c0_i32_0 = arith.constant 0 : i32
    return %c0_i32, %arg1 : i32, i32
  }
  func.func @transform_3(%arg0: i32, %arg1: i32) -> (i32, i32) {
    %c0_i32 = arith.constant 0 : i32
    %c0_i32_0 = arith.constant 0 : i32
    return %arg0, %c0_i32 : i32, i32
  }
}

</mosaic_0001>

<llo_original>
// kernel: tpu_custom_call.1
$region0: #{tpu_custom_call.1}
  #allocation0 [shape = 'u32[]', space=smem, size = 0x4, offset = 0x4, fixed_abs, tag = 'smem constant byte address 0x4 - core index']
  #allocation1 [shape = 'u32[144,128]{1,0:T(1,128)}', space=vmem, size = 0x12000, scoped, tag = 'internal scratch']
  #allocation2 [shape = 'f32[2,32]{1,0:T(2,128)}', space=vmem, size = 0x400, scoped, tag = 'scratch operand']
  #allocation3 [shape = 'f32[2,1]{1,0:T(2,128)}', space=vmem, size = 0x400, scoped, tag = 'scratch operand']
  #allocation4 [shape = 'f32[2,32]{1,0:T(2,128)}', space=vmem, size = 0x400, scoped, tag = 'scratch operand']
  %s0 = inlined_call_operand.hbm [shape: f32[2,8,32], index: 0, kind: input, shape index: {}]
  %s1 = inlined_call_operand.vmem [shape: f32[1,32], index: 1, kind: input, shape index: {}]
  %s2 = inlined_call_operand.vmem [shape: f32[1,8], index: 2, kind: input, shape index: {}]
  %s3 = inlined_call_operand.hbm [shape: f32[2,32], index: 3, kind: output, shape index: {}]
  %s4 = sld [smem:[#allocation0]]
  $region34: #{tpu_custom_call.1} parent=0
    _
  %s6 = ssub.s32 1, %s4
  %s7 = scalar_select 0, %s6, %s4
  $region1: #{tpu_custom_call.1} parent=0
    #allocation5 [shape = 'u8[8192]{0}', space=vmem, size = 0x2000, scoped, tag = 'input window, operand 0, single buffered']
    #allocation6 [shape = 's32[1]{0}', space=sflag, size = 0x4, scoped, tag = 'scoped memory for tpu_custom_call.1']
    #allocation7 [shape = 's32[1]{0}', space=sflag, size = 0x4, scoped, tag = 'scoped memory for tpu_custom_call.1']
    #allocation8 [shape = 'u8[1024]{0}', space=vmem, size = 0x400, scoped, tag = 'output window, operand 0, single buffered']
    %8 = vsyncpa [#allocation6], 0
    %9 = vsyncpa [#allocation7], 0
    // Predicated region
    $region2: #{tpu_custom_call.1} parent=1 // pred_check
      _
    $region3: #{tpu_custom_call.1} parent=1 // pred_check_branch
      %11 = sbr.rel (0) target = $region5
    $region4: #{tpu_custom_call.1} parent=1 // pred_region
      %s13 = ssub.s32 256, 256
      %14 = vsyncadd [#allocation6], %s13
      %s15 = sshll.u32 [#allocation5], 4
      %s16 = int_to_ptr.vmem [resolvable:$true] %s15
      %21 = dma.hbm_to_vmem [thread:$0]  %s0, 256, %s16, [#allocation6], 128, 128, 8
    $region5: #{tpu_custom_call.1} parent=1 // pred_fallthru
      _
    // Predicated region
    $region6: #{tpu_custom_call.1} parent=1 // pred_check
      _
    $region7: #{tpu_custom_call.1} parent=1 // pred_check_branch
      %23 = sbr.rel (0) target = $region9
    $region8: #{tpu_custom_call.1} parent=1 // pred_region
      _
    $region9: #{tpu_custom_call.1} parent=1 // pred_fallthru
      _
    // Predicated region
    $region10: #{tpu_custom_call.1} parent=1 // pred_check
      _
    $region11: #{tpu_custom_call.1} parent=1 // pred_check_branch
      %25 = sbr.rel (0) target = $region13
    $region12: #{tpu_custom_call.1} parent=1 // pred_region
      _
    $region13: #{tpu_custom_call.1} parent=1 // pred_fallthru
      _
    // Predicated region
    $region14: #{tpu_custom_call.1} parent=1 // pred_check
      _
    $region15: #{tpu_custom_call.1} parent=1 // pred_check_branch
      %27 = sbr.rel (0) target = $region17
    $region16: #{tpu_custom_call.1} parent=1 // pred_region
      %28 = dma.done [#allocation6], 256
    $region17: #{tpu_custom_call.1} parent=1 // pred_fallthru
      _
    %p29 = scmp.eq.s32.totalorder 0, 0
    // Predicated region
    $region18: #{tpu_custom_call.1} parent=1 // pred_check
      %p30 = pneg %p29
    $region19: #{tpu_custom_call.1} parent=1 // pred_check_branch
      %32 = sbr.rel (%p30) target = $region21
    $region20: #{tpu_custom_call.1} parent=1 // pred_region
      %vm33 = vcmask 254976
      %34 = vst.msk [vmem:[#allocation2] sm:$0x3] %vm33, 0.0
      %vm35 = vcmask 1024
      %36 = vst.msk [vmem:[#allocation3] sm:$0x3] %vm35, 0.0
      %37 = vst.msk [vmem:[#allocation4] sm:$0x3] %vm33, 0.0
    $region21: #{tpu_custom_call.1} parent=1 // pred_fallthru
      _
    %v38 = vld [vmem:[#allocation5] sm:$0xff]
    %v39 = vld [vmem:[#allocation5 + $0x8] sm:$0xff]
    %v40 = vld [vmem:[%s1] sm:$0x1]
    %v41 = vld [vmem:[%s2] sm:$0x1]
    %v43 = vlaneseq
    %v44 = vshrl.u32 %v43, 7
    %v45 = vsub.s32 0, %v44
    %v46 = vrot.slane %v40, %v45
    %v48 = vmul.f32 %v38, %v46
    %v49 = vmul.f32 %v39, %v46
    %vm50 = vcmask 261120
    %v51 = vsel %vm50, %v48, 0.0
    %52 = vadd.xlane.f32.xlu0 %v51
    %v53 = vpop.xlane.xlu0 %52
    %v54 = vsel %vm50, %v49, 0.0
    %55 = vadd.xlane.f32.xlu0 %v54
    %v56 = vpop.xlane.xlu0 %55
    %v58 = vlaneseq
    %v59 = vshrl.u32 %v58, 7
    %v60 = vsub.s32 0, %v59
    %v61 = vrot.slane %v41, %v60
    %63 = vbcast.lane.b32.xlu0 %v61, 256
    %v64 = vpop.permute.xlu0 %63
    %v66 = vadd.f32 %v53, %v64
    %v67 = vadd.f32 %v56, %v64
    %v68 = vtanh.pop %v66
    %v69 = vtanh.pop %v67
    %v70 = vmul.f32 %v68, 1.442695
    %v71 = vpow.pop %v70
    %v72 = vmul.f32 %v69, 1.442695
    %v73 = vpow.pop %v72
    %v74 = vld [vmem:[#allocation2] sm:$0x3]
    %76 = vset.pattern.permute.xlu0 0
    %77 = vperm.xlu0 %76, %v71
    %v78 = vpop.permute.xlu0 %77
    %81 = vset.pattern.permute.xlu0 0
    %82 = vperm.xlu0 %81, %v73
    %v83 = vpop.permute.xlu0 %82
    %v85 = vmul.f32 %v38, %v78
    %v86 = vmul.f32 %v39, %v83
    %v87 = vsel %vm50, %v85, 0.0
    %v88 = vrot.slane %v87, 4
    %v89 = vadd.f32 %v87, %v88
    %v90 = vrot.slane %v89, 2
    %v91 = vadd.f32 %v89, %v90
    %v92 = vrot.slane %v91, 1
    %v93 = vadd.f32 %v91, %v92
    %v94 = vsel %vm50, %v86, 0.0
    %v95 = vrot.slane %v94, 4
    %v96 = vadd.f32 %v94, %v95
    %v97 = vrot.slane %v96, 2
    %v98 = vadd.f32 %v96, %v97
    %v99 = vrot.slane %v98, 1
    %v100 = vadd.f32 %v98, %v99
    %vm103 = vcmask 1041409
    %v104 = vsel %vm103, %v100, %v93
    %v106 = vadd.f32 %v74, %v104
    %vm107 = vcmask 254976
    %108 = vst.msk [vmem:[#allocation2] sm:$0x3] %vm107, %v106
    %v109 = vld [vmem:[#allocation3] sm:$0x3]
    %v110 = vlaneseq
    %v111 = vand.u32 %v110, 127
    %v112 = vlaneseq
    %v113 = vshrl.u32 %v112, 7
    %v114 = vsub.s32 %v111, %v113
    %v115 = vrot.slane %v78, %v114
    %v116 = vlaneseq
    %v117 = vshrl.u32 %v116, 7
    %v118 = vsub.s32 %v111, %v117
    %v119 = vrot.slane %v83, %v118
    %v120 = vsel %vm103, %v119, %v115
    %vm122 = vcmask 58368
    %v123 = vsel %vm122, %v120, 0.0
    %124 = vadd.xlane.f32.xlu0 %v123
    %v125 = vpop.xlane.xlu0 %124
    %v126 = vadd.f32 %v109, %v125
    %vm127 = vcmask 1024
    %128 = vst.msk [vmem:[#allocation3] sm:$0x3] %vm127, %v126
    %v129 = vld [vmem:[#allocation4] sm:$0x3]
    %v130 = vsel %vm50, %v38, 0.0
    %v131 = vrot.slane %v130, 4
    %v132 = vadd.f32 %v130, %v131
    %v133 = vrot.slane %v132, 2
    %v134 = vadd.f32 %v132, %v133
    %v135 = vrot.slane %v134, 1
    %v136 = vadd.f32 %v134, %v135
    %v137 = vsel %vm50, %v39, 0.0
    %v138 = vrot.slane %v137, 4
    %v139 = vadd.f32 %v137, %v138
    %v140 = vrot.slane %v139, 2
    %v141 = vadd.f32 %v139, %v140
    %v142 = vrot.slane %v141, 1
    %v143 = vadd.f32 %v141, %v142
    %v146 = vsel %vm103, %v143, %v136
    %v148 = vadd.f32 %v129, %v146
    %149 = vst.msk [vmem:[#allocation4] sm:$0x3] %vm107, %v148
    // Predicated region
    $region22: #{tpu_custom_call.1} parent=1 // pred_check
      %p150 = pneg %p29
    $region23: #{tpu_custom_call.1} parent=1 // pred_check_branch
      %152 = sbr.rel (%p150) target = $region25
    $region24: #{tpu_custom_call.1} parent=1 // pred_region
      %v153 = vld [vmem:[#allocation3] sm:$0x3]
      %v154 = vrcp.pop %v153
      %v155 = vmul.f32 %v153, %v154
      %v156 = vsub.f32 2.0, %v155
      %v157 = vmul.f32 %v154, %v156
      %v158 = vld [vmem:[#allocation2] sm:$0x3]
      %160 = vset.pattern.permute.xlu0 0
      %161 = vperm.xlu0 %160, %v157
      %v162 = vpop.permute.xlu0 %161
      %v164 = vmul.f32 %v158, %v162
      %v165 = vld [vmem:[#allocation4] sm:$0x3]
      %v166 = vmul.f32 %v165, 1e-10
      %v167 = vadd.f32 %v164, %v166
      %168 = vst.msk [vmem:[#allocation8] sm:$0x3] %vm107, %v167
    $region25: #{tpu_custom_call.1} parent=1 // pred_fallthru
      _
    // Predicated region
    $region26: #{tpu_custom_call.1} parent=1 // pred_check
      _
    $region27: #{tpu_custom_call.1} parent=1 // pred_check_branch
      %170 = sbr.rel (0) target = $region29
    $region28: #{tpu_custom_call.1} parent=1 // pred_region
      %s172 = ssub.s32 32, 32
      %173 = vsyncadd [#allocation7], %s172
      %s175 = sshll.u32 [#allocation8], 4
      %s176 = int_to_ptr.vmem [resolvable:$true] %s175
      %178 = dma.vmem_to_hbm [thread:$0]  %s176, 32, %s3, [#allocation7]
    $region29: #{tpu_custom_call.1} parent=1 // pred_fallthru
      _
    // Predicated region
    $region30: #{tpu_custom_call.1} parent=1 // pred_check
      _
    $region31: #{tpu_custom_call.1} parent=1 // pred_check_branch
      %180 = sbr.rel (0) target = $region33
    $region32: #{tpu_custom_call.1} parent=1 // pred_region
      %181 = dma.done [#allocation7], 32
    $region33: #{tpu_custom_call.1} parent=1 // pred_fallthru
      _
    %182 = vsyncpa [#allocation6], 1
    %183 = vsyncpa [#allocation7], 1

</llo_original>
